<compile_context>
chip_gen: v6e
topology: v6e:2x2x1
jax: 0.10.0
libtpu: 0.0.40
codegen_flags: <defaults>
</compile_context>

<pallas_src>
import jax
import jax.numpy as jnp
import numpy as np
from jax.experimental import pallas as pl
from jax.experimental.pallas import tpu as pltpu

EPS = 1e-5        # nn.BatchNorm2d default eps
TP = 512          # rows (of flattened N*H*W) per grid step for 1x1-conv kernels
LANE = 128        # lane width: channel axes are padded to a multiple of this


# ---------------------------------------------------------------------------
# Small helpers
# ---------------------------------------------------------------------------
def _round_up(x, m):
    return ((x + m - 1) // m) * m


def _pad_to(a, shape):
    return jnp.pad(a, [(0, t - s) for s, t in zip(a.shape, shape)])


def _cparams():
    # Tiles here are small; at ResNet-scale channel counts raise this (and
    # re-derive the tile budget for v7x's 64 MiB physical VMEM).
    return pltpu.CompilerParams(
        dimension_semantics=("parallel",),
        vmem_limit_bytes=32 * 1024 * 1024,
    )


def _bn_affine(sum_parts, sq_parts, count, gamma, beta):
    """Fold per-tile (G,1,C) partial sums into a BN affine: scale/shift (1,C)."""
    total = jnp.sum(sum_parts[:, 0, :], axis=0)
    total_sq = jnp.sum(sq_parts[:, 0, :], axis=0)
    mean = total / count
    var = jnp.maximum(total_sq / count - mean * mean, 0.0)
    scale = gamma * jax.lax.rsqrt(var + EPS)
    shift = beta - mean * scale
    return scale, shift


# ---------------------------------------------------------------------------
# Pallas kernels
# ---------------------------------------------------------------------------
def _conv1x1_stats_kernel(x_ref, w_ref, h_ref, sum_ref, sq_ref):
    """[TP, K] @ [K, C] (bf16 in, f32 acc); emits raw activations (bf16) plus
    this tile's per-channel sum / sum-of-squares partials (single pass)."""
    h = jnp.dot(x_ref[...], w_ref[...], preferred_element_type=jnp.float32)
    h_ref[...] = h.astype(h_ref.dtype)
    sum_ref[0] = jnp.sum(h, axis=0, keepdims=True)
    sq_ref[0] = jnp.sum(h * h, axis=0, keepdims=True)


def _make_conv2_kernel(Hp, Wp, OW, H, W, d, s, Ho, Wo, Cp):
    """3x3 conv for one image: fused bn1-affine + ReLU, then 9 shifted
    [OW, Cp] @ [Cp, Cp] MXU matmuls accumulated in f32 (no im2col), plus bn2
    partial statistics over the valid (strided) output positions only."""

    def kernel(hp_ref, w2_ref, sc_ref, sh_ref, o_ref, sum_ref, sq_ref, hbuf_ref):
        # bn1 (precomputed affine) + ReLU; re-zero the spatial halo (it was
        # zero-padded on the *raw* activations, so the affine made it `shift`).
        h = hp_ref[0].astype(jnp.float32)
        h = jnp.maximum(h * sc_ref[...] + sh_ref[...], 0.0)
        fi = jax.lax.broadcasted_iota(jnp.int32, (Hp * Wp, 1), 0)
        ri = fi // Wp
        ci = fi % Wp
        interior = (ri >= d) & (ri < d + H) & (ci >= d) & (ci < d + W)
        hbuf_ref[...] = jnp.where(interior, h, 0.0).astype(jnp.bfloat16)

        # 3x3 conv as 9 shifted matmuls over the flattened (row*Wp+col) plane.
        acc = jnp.zeros((OW, Cp), jnp.float32)
        for ky in range(3):
            for kx in range(3):
                off = ky * d * Wp + kx * d
                acc = acc + jnp.dot(hbuf_ref[pl.ds(off, OW), :],
                                    w2_ref[ky * 3 + kx],
                                    preferred_element_type=jnp.float32)
        o_ref[0] = acc.astype(jnp.bfloat16)

        # bn2 partial statistics: only positions that land on the true
        # (stride-s) output grid and inside the un-padded width count.
        fo = jax.lax.broadcasted_iota(jnp.int32, (OW, 1), 0)
        ro = fo // Wp
        co = fo % Wp
        valid = (ro % s == 0) & (ro < Ho * s) & (co % s == 0) & (co < Wo * s)
        av = jnp.where(valid, acc, 0.0)
        sum_ref[0] = jnp.sum(av, axis=0, keepdims=True)
        sq_ref[0] = jnp.sum(av * av, axis=0, keepdims=True)

    return kernel


def _make_conv3_ds_kernel(tp, n_valid_rows):
    """Fused bn2-affine + ReLU + conv3(1x1) + downsample conv(1x1), with bn3 /
    bn0 partial statistics (row-padding masked out of the stats)."""

    def kernel(h2_ref, sc2_ref, sh2_ref, w3_ref, xr_ref, wd_ref,
               y_ref, r_ref, s3s_ref, s3q_ref, s0s_ref, s0q_ref):
        row = pl.program_id(0) * tp + jax.lax.broadcasted_iota(
            jnp.int32, (tp, 1), 0)
        valid = row < n_valid_rows

        hn = jnp.maximum(
            h2_ref[...].astype(jnp.float32) * sc2_ref[...] + sh2_ref[...], 0.0)
        y = jnp.dot(hn.astype(jnp.bfloat16), w3_ref[...],
                    preferred_element_type=jnp.float32)
        y_ref[...] = y
        yv = jnp.where(valid, y, 0.0)
        s3s_ref[0] = jnp.sum(yv, axis=0, keepdims=True)
        s3q_ref[0] = jnp.sum(yv * yv, axis=0, keepdims=True)

        r = jnp.dot(xr_ref[...], wd_ref[...], preferred_element_type=jnp.float32)
        r_ref[...] = r
        rv = jnp.where(valid, r, 0.0)
        s0s_ref[0] = jnp.sum(rv, axis=0, keepdims=True)
        s0q_ref[0] = jnp.sum(rv * rv, axis=0, keepdims=True)

    return kernel


def _make_conv3_id_kernel(tp, n_valid_rows):
    """Fused bn2-affine + ReLU + conv3(1x1), with bn3 partial statistics."""

    def kernel(h2_ref, sc2_ref, sh2_ref, w3_ref, y_ref, s3s_ref, s3q_ref):
        row = pl.program_id(0) * tp + jax.lax.broadcasted_iota(
            jnp.int32, (tp, 1), 0)
        valid = row < n_valid_rows

        hn = jnp.maximum(
            h2_ref[...].astype(jnp.float32) * sc2_ref[...] + sh2_ref[...], 0.0)
        y = jnp.dot(hn.astype(jnp.bfloat16), w3_ref[...],
                    preferred_element_type=jnp.float32)
        y_ref[...] = y
        yv = jnp.where(valid, y, 0.0)
        s3s_ref[0] = jnp.sum(yv, axis=0, keepdims=True)
        s3q_ref[0] = jnp.sum(yv * yv, axis=0, keepdims=True)

    return kernel


def _final_ds_kernel(y_ref, r_ref, sc3_ref, sh3_ref, sc0_ref, sh0_ref, o_ref):
    """bn3-affine + bn0-affine + residual add + ReLU."""
    y = y_ref[...] * sc3_ref[...] + sh3_ref[...]
    r = r_ref[...] * sc0_ref[...] + sh0_ref[...]
    o_ref[...] = jnp.maximum(y + r, 0.0)


def _final_id_kernel(y_ref, x_ref, sc3_ref, sh3_ref, o_ref):
    """bn3-affine + identity residual add + ReLU."""
    y = y_ref[...] * sc3_ref[...] + sh3_ref[...]
    o_ref[...] = jnp.maximum(y + x_ref[...].astype(jnp.float32), 0.0)


# ---------------------------------------------------------------------------
# Forward pass (NHWC core + NCHW shim for PyTorch-style I/O)
# ---------------------------------------------------------------------------
def bottleneck_forward_nhwc(x_nhwc, params, *, stride=1, dilation=1):
    N, H, W, Cin = x_nhwc.shape
    C = params["w1"].shape[1]
    Cout = params["w3"].shape[1]
    s, d = stride, dilation
    has_ds = params.get("wd") is not None
    if not has_ds and (s != 1 or Cin != Cout):
        raise ValueError("identity residual requires stride == 1 and Cin == Cout")

    f32, bf16 = jnp.float32, jnp.bfloat16
    Cin_p = _round_up(Cin, LANE)
    C_p = _round_up(C, LANE)
    Cout_p = _round_up(Cout, LANE)
    Ho = (H - 1) // s + 1
    Wo = (W - 1) // s + 1
    Wp = W + 2 * d
    Hp = H + 2 * d + 1          # +1 spare bottom row for the wide-row conv trick
    OW = H * Wp                 # stride-1 "wide" conv2 output rows per image

    # ---- lane-dense (channel-padded) bf16 weights / f32 BN params -----------
    w1 = _pad_to(params["w1"].astype(bf16), (Cin_p, C_p))
    w2 = _pad_to(params["w2"].astype(bf16), (3, 3, C_p, C_p)).reshape(9, C_p, C_p)
    w3 = _pad_to(params["w3"].astype(bf16), (C_p, Cout_p))
    g1 = _pad_to(params["g1"].astype(f32), (1, C_p))
    b1 = _pad_to(params["b1"].astype(f32), (1, C_p))
    g2 = _pad_to(params["g2"].astype(f32), (1, C_p))
    b2 = _pad_to(params["b2"].astype(f32), (1, C_p))
    g3 = _pad_to(params["g3"].astype(f32), (1, Cout_p))
    b3 = _pad_to(params["b3"].astype(f32), (1, Cout_p))

    # ---- stage 1: conv1 (1x1) tiled matmul + bn1 partial stats --------------
    P1 = N * H * W
    P1p = _round_up(P1, TP)
    G1 = P1p // TP
    x2d = _pad_to(x_nhwc.astype(bf16).reshape(P1, Cin), (P1p, Cin_p))
    h1_raw, s1_sum, s1_sq = pl.pallas_call(
        _conv1x1_stats_kernel,
        grid=(G1,),
        in_specs=[pl.BlockSpec((TP, Cin_p), lambda i: (i, 0)),
                  pl.BlockSpec((Cin_p, C_p), lambda i: (0, 0))],
        out_specs=[pl.BlockSpec((TP, C_p), lambda i: (i, 0)),
                   pl.BlockSpec((1, 1, C_p), lambda i: (i, 0, 0)),
                   pl.BlockSpec((1, 1, C_p), lambda i: (i, 0, 0))],
        out_shape=[jax.ShapeDtypeStruct((P1p, C_p), bf16),
                   jax.ShapeDtypeStruct((G1, 1, C_p), f32),
                   jax.ShapeDtypeStruct((G1, 1, C_p), f32)],
        compiler_params=_cparams(),
    )(x2d, w1)
    sc1, sh1 = _bn_affine(s1_sum, s1_sq, P1, g1, b1)

    # ---- stage 2: conv2 (3x3) as 9 shifted matmuls + bn2 partial stats ------
    # bn1 + ReLU are fused into the conv2 kernel; the *raw* conv1 output is
    # zero-padded here (one bf16 pass) and the kernel re-zeros the halo.
    h1_img = h1_raw[:P1].reshape(N, H, W, C_p)
    h1_pad = jnp.pad(h1_img, ((0, 0), (d, d + 1), (d, d), (0, 0)))
    h1_pad = h1_pad.reshape(N, Hp * Wp, C_p)
    conv2_kernel = _make_conv2_kernel(Hp, Wp, OW, H, W, d, s, Ho, Wo, C_p)
    h2_wide, s2_sum, s2_sq = pl.pallas_call(
        conv2_kernel,
        grid=(N,),
        in_specs=[pl.BlockSpec((1, Hp * Wp, C_p), lambda n: (n, 0, 0)),
                  pl.BlockSpec((9, C_p, C_p), lambda n: (0, 0, 0)),
                  pl.BlockSpec((1, C_p), lambda n: (0, 0)),
                  pl.BlockSpec((1, C_p), lambda n: (0, 0))],
        out_specs=[pl.BlockSpec((1, OW, C_p), lambda n: (n, 0, 0)),
                   pl.BlockSpec((1, 1, C_p), lambda n: (n, 0, 0)),
                   pl.BlockSpec((1, 1, C_p), lambda n: (n, 0, 0))],
        out_shape=[jax.ShapeDtypeStruct((N, OW, C_p), bf16),
                   jax.ShapeDtypeStruct((N, 1, C_p), f32),
                   jax.ShapeDtypeStruct((N, 1, C_p), f32)],
        scratch_shapes=[pltpu.VMEM((Hp * Wp, C_p), bf16)],
        compiler_params=_cparams(),
    )(h1_pad, w2, sc1, sh1)
    sc2, sh2 = _bn_affine(s2_sum, s2_sq, N * Ho * Wo, g2, b2)

    # valid (strided) conv2 outputs from the lane-dense wide buffer
    h2 = h2_wide.reshape(N, H, Wp, C_p)
    h2 = h2[:, :(Ho - 1) * s + 1:s, :(Wo - 1) * s + 1:s, :]
    P2 = N * Ho * Wo
    P2p = _round_up(P2, TP)
    G2 = P2p // TP
    h2_2d = _pad_to(h2.reshape(P2, C_p), (P2p, C_p))

    row_spec_c = pl.BlockSpec((TP, C_p), lambda i: (i, 0))
    row_spec_o = pl.BlockSpec((TP, Cout_p), lambda i: (i, 0))
    vec_spec_c = pl.BlockSpec((1, C_p), lambda i: (0, 0))
    vec_spec_o = pl.BlockSpec((1, Cout_p), lambda i: (0, 0))
    stat_spec_o = pl.BlockSpec((1, 1, Cout_p), lambda i: (i, 0, 0))
    stat_shape_o = jax.ShapeDtypeStruct((G2, 1, Cout_p), f32)
    y_shape = jax.ShapeDtypeStruct((P2p, Cout_p), f32)
    out_shape2d = jax.ShapeDtypeStruct((P2p, Cout_p), f32)

    # ---- stage 3: bn2-norm + conv3 (1x1) [+ downsample conv] + stats --------
    if has_ds:
        wd = _pad_to(params["wd"].astype(bf16), (Cin_p, Cout_p))
        g0 = _pad_to(params["g0"].astype(f32), (1, Cout_p))
        b0 = _pad_to(params["b0"].astype(f32), (1, Cout_p))
        # TODO(synk): the strided residual read could be expressed via the
        # BlockSpec index_map instead of this wrapper-side slice.
        xr = x_nhwc[:, :(Ho - 1) * s + 1:s, :(Wo - 1) * s + 1:s, :]
        xr2d = _pad_to(xr.astype(bf16).reshape(P2, Cin), (P2p, Cin_p))

        kernel_c = _make_conv3_ds_kernel(TP, P2)
        y3, r3, s3_sum, s3_sq, s0_sum, s0_sq = pl.pallas_call(
            kernel_c,
            grid=(G2,),
            in_specs=[row_spec_c, vec_spec_c, vec_spec_c,
                      pl.BlockSpec((C_p, Cout_p), lambda i: (0, 0)),
                      pl.BlockSpec((TP, Cin_p), lambda i: (i, 0)),
                      pl.BlockSpec((Cin_p, Cout_p), lambda i: (0, 0))],
            out_specs=[row_spec_o, row_spec_o,
                       stat_spec_o, stat_spec_o, stat_spec_o, stat_spec_o],
            out_shape=[y_shape, y_shape,
                       stat_shape_o, stat_shape_o, stat_shape_o, stat_shape_o],
            compiler_params=_cparams(),
        )(h2_2d, sc2, sh2, w3, xr2d, wd)
        sc3, sh3 = _bn_affine(s3_sum, s3_sq, P2, g3, b3)
        sc0, sh0 = _bn_affine(s0_sum, s0_sq, P2, g0, b0)

        out2d = pl.pallas_call(
            _final_ds_kernel,
            grid=(G2,),
            in_specs=[row_spec_o, row_spec_o,
                      vec_spec_o, vec_spec_o, vec_spec_o, vec_spec_o],
            out_specs=row_spec_o,
            out_shape=out_shape2d,
            compiler_params=_cparams(),
        )(y3, r3, sc3, sh3, sc0, sh0)
    else:
        kernel_c = _make_conv3_id_kernel(TP, P2)
        y3, s3_sum, s3_sq = pl.pallas_call(
            kernel_c,
            grid=(G2,),
            in_specs=[row_spec_c, vec_spec_c, vec_spec_c,
                      pl.BlockSpec((C_p, Cout_p), lambda i: (0, 0))],
            out_specs=[row_spec_o, stat_spec_o, stat_spec_o],
            out_shape=[y_shape, stat_shape_o, stat_shape_o],
            compiler_params=_cparams(),
        )(h2_2d, sc2, sh2, w3)
        sc3, sh3 = _bn_affine(s3_sum, s3_sq, P2, g3, b3)

        # identity residual: here P1p == P2p and Cin_p == Cout_p, so reuse x2d.
        out2d = pl.pallas_call(
            _final_id_kernel,
            grid=(G2,),
            in_specs=[row_spec_o,
                      pl.BlockSpec((TP, Cout_p), lambda i: (i, 0)),
                      vec_spec_o, vec_spec_o],
            out_specs=row_spec_o,
            out_shape=out_shape2d,
            compiler_params=_cparams(),
        )(y3, x2d, sc3, sh3)

    return out2d[:P2, :Cout].reshape(N, Ho, Wo, Cout)


def bottleneck_forward(x_nchw, params, *, stride=1, dilation=1):
    # NCHW (PyTorch I/O) shim around the NHWC core; at a real block boundary
    # the NHWC entry point avoids these layout transposes entirely.
    x = jnp.transpose(x_nchw, (0, 2, 3, 1)).astype(jnp.float32)
    out = bottleneck_forward_nhwc(x, params, stride=stride, dilation=dilation)
    return jnp.transpose(out, (0, 3, 1, 2))


# ---------------------------------------------------------------------------
# Pure-JAX reference (lax.conv, NCHW/OIHW like PyTorch) for correctness check
# ---------------------------------------------------------------------------
def _conv_ref(x, w_oihw, stride=1, padding=0, dilation=1):
    return jax.lax.conv_general_dilated(
        x, w_oihw, window_strides=(stride, stride),
        padding=[(padding, padding), (padding, padding)],
        rhs_dilation=(dilation, dilation),
        dimension_numbers=("NCHW", "OIHW", "NCHW"),
        precision=jax.lax.Precision.HIGHEST)


def bottleneck_ref(x, params, *, stride=1, dilation=1):
    def bn(h, g, b):
        g = g.reshape(1, -1, 1, 1)
        b = b.reshape(1, -1, 1, 1)
        m = jnp.mean(h, axis=(0, 2, 3), keepdims=True)
        v = jnp.mean(jnp.square(h - m), axis=(0, 2, 3), keepdims=True)
        return (h - m) * jax.lax.rsqrt(v + EPS) * g + b

    relu = lambda t: jnp.maximum(t, 0.0)
    w1 = jnp.transpose(params["w1"])[:, :, None, None]           # OIHW
    w2 = jnp.transpose(params["w2"], (3, 2, 0, 1))               # HWIO -> OIHW
    w3 = jnp.transpose(params["w3"])[:, :, None, None]
    h = relu(bn(_conv_ref(x, w1), params["g1"], params["b1"]))
    h = relu(bn(_conv_ref(h, w2, stride=stride, padding=dilation,
                          dilation=dilation), params["g2"], params["b2"]))
    h = bn(_conv_ref(h, w3), params["g3"], params["b3"])
    if params.get("wd") is not None:
        wd = jnp.transpose(params["wd"])[:, :, None, None]
        r = bn(_conv_ref(x, wd, stride=stride), params["g0"], params["b0"])
    else:
        r = x
    return relu(h + r)


# ---------------------------------------------------------------------------
# Deterministic parameter init (shapes from Bottleneck.__init__)
# ---------------------------------------------------------------------------
def init_params(key, in_channels, channels, *, expansion=4, downsample=True):
    Cout = channels * expansion
    ks = jax.random.split(key, 14)
    sc = 0.1
    n = jax.random.normal
    p = {
        "w1": sc * n(ks[0], (in_channels, channels), jnp.float32),
        "w2": sc * n(ks[1], (3, 3, channels, channels), jnp.float32),   # HWIO
        "w3": sc * n(ks[2], (channels, Cout), jnp.float32),
        "g1": 1.0 + 0.1 * n(ks[3], (1, channels), jnp.float32),
        "b1": 0.1 * n(ks[4], (1, channels), jnp.float32),
        "g2": 1.0 + 0.1 * n(ks[5], (1, channels), jnp.float32),
        "b2": 0.1 * n(ks[6], (1, channels), jnp.float32),
        "g3": 1.0 + 0.1 * n(ks[7], (1, Cout), jnp.float32),
        "b3": 0.1 * n(ks[8], (1, Cout), jnp.float32),
        "wd": None,
    }
    if downsample:
        p["wd"] = sc * n(ks[9], (in_channels, Cout), jnp.float32)
        p["g0"] = 1.0 + 0.1 * n(ks[10], (1, Cout), jnp.float32)
        p["b0"] = 0.1 * n(ks[11], (1, Cout), jnp.float32)
    return p


if __name__ == "__main__":
    key = jax.random.PRNGKey(0)
    k1, k2, k3, k4 = jax.random.split(key, 4)

    # Case 1: projection residual (Cin != Cout, stride 1, dilation 1).
    N, Cin, H, W, channels = 2, 8, 16, 16, 4
    x = jax.random.normal(k1, (N, Cin, H, W), jnp.float32)
    params = init_params(k2, Cin, channels, downsample=True)
    out = jax.block_until_ready(bottleneck_forward(x, params, stride=1, dilation=1))
    ref = bottleneck_ref(x, params, stride=1, dilation=1)
    np.testing.assert_allclose(np.asarray(out), np.asarray(ref),
                               rtol=5e-2, atol=5e-2)

    # Case 2: identity residual (Cin == channels * expansion).
    Cin2 = channels * 4
    x2 = jax.random.normal(k3, (N, Cin2, H, W), jnp.float32)
    params2 = init_params(k4, Cin2, channels, downsample=False)
    out2 = jax.block_until_ready(bottleneck_forward(x2, params2, stride=1, dilation=1))
    ref2 = bottleneck_ref(x2, params2, stride=1, dilation=1)
    np.testing.assert_allclose(np.asarray(out2), np.asarray(ref2),
                               rtol=5e-2, atol=5e-2)

    print("KERNEL_OK")
</pallas_src>

<mosaic_0001>
module attributes {stable_mosaic.version = 11 : i64} {
  func.func @_conv1x1_stats_kernel(%arg0: i32, %arg1: memref<512x128xbf16, #tpu.memory_space<vmem>>, %arg2: memref<128x128xbf16, #tpu.memory_space<vmem>>, %arg3: memref<512x128xbf16, #tpu.memory_space<vmem>>, %arg4: memref<1x1x128xf32, #tpu.memory_space<vmem>>, %arg5: memref<1x1x128xf32, #tpu.memory_space<vmem>>) attributes {dimension_semantics = [#tpu.dimension_semantics<parallel>], iteration_bounds = array<i64: 1>, scalar_prefetch = 0 : i64, scratch_operands = 0 : i64, tpu.core_type = #tpu.core_type<tc>, window_params = [{transform_indices = @transform_0, window_bounds = array<i64: 512, 128>}, {pipeline_mode = #tpu.pipeline_mode<synchronous>, transform_indices = @transform_1, window_bounds = array<i64: 128, 128>}, {transform_indices = @transform_2, window_bounds = array<i64: 512, 128>}, {transform_indices = @transform_3, window_bounds = array<i64: 1, 1, 128>}, {transform_indices = @transform_4, window_bounds = array<i64: 1, 1, 128>}]} {
    %c0 = arith.constant 0 : index
    %c0_0 = arith.constant 0 : index
    %0 = vector.load %arg1[%c0, %c0_0] : memref<512x128xbf16, #tpu.memory_space<vmem>>, vector<512x128xbf16>
    %c0_1 = arith.constant 0 : index
    %c0_2 = arith.constant 0 : index
    %1 = vector.load %arg2[%c0_1, %c0_2] : memref<128x128xbf16, #tpu.memory_space<vmem>>, vector<128x128xbf16>
    %cst = arith.constant dense<0.000000e+00> : vector<512x128xf32>
    %2 = tpu.matmul %0, %1, %cst {dimension_numbers = #tpu.dot_dimension_numbers<[1], [0], [0], [1], [0, 0, 1, 1], [], []>} : vector<512x128xbf16>, vector<128x128xbf16>, vector<512x128xf32> -> vector<512x128xf32>
    %3 = arith.truncf %2 : vector<512x128xf32> to vector<512x128xbf16>
    %c0_3 = arith.constant 0 : index
    %c0_4 = arith.constant 0 : index
    %4 = vector.load %arg3[%c0_3, %c0_4] : memref<512x128xbf16, #tpu.memory_space<vmem>>, vector<512x128xbf16>
    tpu.vector_store %arg3[%c0_3, %c0_4], %3 {strides = array<i32>} : memref<512x128xbf16, #tpu.memory_space<vmem>>, vector<512x128xbf16>,
    %cst_5 = arith.constant dense<0.000000e+00> : vector<128xf32>
    %5 = vector.multi_reduction <add>, %2, %cst_5 [0] : vector<512x128xf32> to vector<128xf32>
    %6 = vector.shape_cast %5 : vector<128xf32> to vector<1x128xf32>
    %c0_6 = arith.constant 0 : index
    %c0_7 = arith.constant 0 : index
    %c0_8 = arith.constant 0 : index
    %7 = vector.load %arg4[%c0_6, %c0_7, %c0_8] : memref<1x1x128xf32, #tpu.memory_space<vmem>>, vector<1x1x128xf32>
    %8 = vector.shape_cast %7 : vector<1x1x128xf32> to vector<1x128xf32>
    %9 = vector.shape_cast %6 : vector<1x128xf32> to vector<1x1x128xf32>
    tpu.vector_store %arg4[%c0_6, %c0_7, %c0_8], %9 {strides = array<i32>} : memref<1x1x128xf32, #tpu.memory_space<vmem>>, vector<1x1x128xf32>,
    %10 = arith.mulf %2, %2 : vector<512x128xf32>
    %cst_9 = arith.constant dense<0.000000e+00> : vector<128xf32>
    %11 = vector.multi_reduction <add>, %10, %cst_9 [0] : vector<512x128xf32> to vector<128xf32>
    %12 = vector.shape_cast %11 : vector<128xf32> to vector<1x128xf32>
    %c0_10 = arith.constant 0 : index
    %c0_11 = arith.constant 0 : index
    %c0_12 = arith.constant 0 : index
    %13 = vector.load %arg5[%c0_10, %c0_11, %c0_12] : memref<1x1x128xf32, #tpu.memory_space<vmem>>, vector<1x1x128xf32>
    %14 = vector.shape_cast %13 : vector<1x1x128xf32> to vector<1x128xf32>
    %15 = vector.shape_cast %12 : vector<1x128xf32> to vector<1x1x128xf32>
    tpu.vector_store %arg5[%c0_10, %c0_11, %c0_12], %15 {strides = array<i32>} : memref<1x1x128xf32, #tpu.memory_space<vmem>>, vector<1x1x128xf32>,
    return
  }
  func.func @transform_0(%arg0: i32) -> (i32, i32) {
    %c0_i32 = arith.constant 0 : i32
    %c0_i32_0 = arith.constant 0 : i32
    return %arg0, %c0_i32 : i32, i32
  }
  func.func @transform_1(%arg0: i32) -> (i32, i32) {
    %c0_i32 = arith.constant 0 : i32
    %c0_i32_0 = arith.constant 0 : i32
    %c0_i32_1 = arith.constant 0 : i32
    return %c0_i32, %c0_i32_0 : i32, i32
  }
  func.func @transform_2(%arg0: i32) -> (i32, i32) {
    %c0_i32 = arith.constant 0 : i32
    %c0_i32_0 = arith.constant 0 : i32
    return %arg0, %c0_i32 : i32, i32
  }
  func.func @transform_3(%arg0: i32) -> (i32, i32, i32) {
    %c0_i32 = arith.constant 0 : i32
    %c0_i32_0 = arith.constant 0 : i32
    %c0_i32_1 = arith.constant 0 : i32
    return %arg0, %c0_i32, %c0_i32_0 : i32, i32, i32
  }
  func.func @transform_4(%arg0: i32) -> (i32, i32, i32) {
    %c0_i32 = arith.constant 0 : i32
    %c0_i32_0 = arith.constant 0 : i32
    %c0_i32_1 = arith.constant 0 : i32
    return %arg0, %c0_i32, %c0_i32_0 : i32, i32, i32
  }
}

</mosaic_0001>

<llo_original>
// kernel: tpu_custom_call.1
$region0: #{tpu_custom_call.1}
  #allocation0 [shape = 'u32[]', space=smem, size = 0x4, offset = 0x4, fixed_abs, tag = 'smem constant byte address 0x4 - core index']
  #allocation1 [shape = 'u32[144,128]{1,0:T(1,128)}', space=vmem, size = 0x12000, scoped, tag = 'internal scratch']
  %s0 = inlined_call_operand.hbm [shape: bf16[512,128], index: 0, kind: input, shape index: {}]
  %s1 = inlined_call_operand.hbm [shape: bf16[128,128], index: 1, kind: input, shape index: {}]
  %s2 = inlined_call_operand.hbm [shape: bf16[512,128], index: 2, kind: output, shape index: {0}]
  %s3 = inlined_call_operand.hbm [shape: f32[1,1,128], index: 3, kind: output, shape index: {1}]
  %s4 = inlined_call_operand.hbm [shape: f32[1,1,128], index: 4, kind: output, shape index: {2}]
  %5 = xla_tuple %s2, %s3, %s4
  %s6 = sld [smem:[#allocation0]]
  $region42: #{tpu_custom_call.1} parent=0
    _
  %s8 = ssub.s32 1, %s6
  %s9 = scalar_select 0, %s8, %s6
  $region1: #{tpu_custom_call.1} parent=0
    #allocation2 [shape = 'u8[131072]{0}', space=vmem, size = 0x20000, scoped, tag = 'input window, operand 0, single buffered']
    #allocation3 [shape = 's32[1]{0}', space=sflag, size = 0x4, scoped, tag = 'scoped memory for tpu_custom_call.1']
    #allocation4 [shape = 's32[1]{0}', space=sflag, size = 0x4, scoped, tag = 'scoped memory for tpu_custom_call.1']
    #allocation5 [shape = 'u8[32768]{0}', space=vmem, size = 0x8000, scoped, tag = 'input window, operand 1, single buffered']
    #allocation6 [shape = 's32[1]{0}', space=sflag, size = 0x4, scoped, tag = 'scoped memory for tpu_custom_call.1']
    #allocation7 [shape = 'u8[131072]{0}', space=vmem, size = 0x20000, scoped, tag = 'output window, operand 0, single buffered']
    #allocation8 [shape = 'u8[512]{0}', space=vmem, size = 0x400, scoped, tag = 'output window, operand 1, single buffered']
    #allocation9 [shape = 's32[1]{0}', space=sflag, size = 0x4, scoped, tag = 'scoped memory for tpu_custom_call.1']
    #allocation10 [shape = 'u8[512]{0}', space=vmem, size = 0x400, scoped, tag = 'output window, operand 2, single buffered']
    %10 = vsyncpa [#allocation3], 0
    %11 = vsyncpa [#allocation6], 0
    %12 = vsyncpa [#allocation4], 0
    %13 = vsyncpa [#allocation9], 0
    // Predicated region
    $region2: #{tpu_custom_call.1} parent=1 // pred_check
      _
    $region3: #{tpu_custom_call.1} parent=1 // pred_check_branch
      %15 = sbr.rel (0) target = $region5
    $region4: #{tpu_custom_call.1} parent=1 // pred_region
      %s17 = ssub.s32 4096, 4096
      %18 = vsyncadd [#allocation3], %s17
      %s19 = sshll.u32 [#allocation2], 4
      %s20 = int_to_ptr.vmem [resolvable:$true] %s19
      %25 = dma.hbm_to_vmem [thread:$0]  %s0, 4096, %s20, [#allocation3], 64, 64, 4
    $region5: #{tpu_custom_call.1} parent=1 // pred_fallthru
      _
    // Predicated region
    $region6: #{tpu_custom_call.1} parent=1 // pred_check
      _
    $region7: #{tpu_custom_call.1} parent=1 // pred_check_branch
      %27 = sbr.rel (0) target = $region9
    $region8: #{tpu_custom_call.1} parent=1 // pred_region
      %s29 = ssub.s32 1024, 1024
      %30 = vsyncadd [#allocation6], %s29
      %s31 = sshll.u32 [#allocation5], 4
      %s32 = int_to_ptr.vmem [resolvable:$true] %s31
      %37 = dma.hbm_to_vmem [thread:$0]  %s1, 1024, %s32, [#allocation6], 64, 64, 4
    $region9: #{tpu_custom_call.1} parent=1 // pred_fallthru
      _
    // Predicated region
    $region10: #{tpu_custom_call.1} parent=1 // pred_check
      _
    $region11: #{tpu_custom_call.1} parent=1 // pred_check_branch
      %39 = sbr.rel (0) target = $region13
    $region12: #{tpu_custom_call.1} parent=1 // pred_region
      %40 = dma.done [#allocation3], 4096
    $region13: #{tpu_custom_call.1} parent=1 // pred_fallthru
      _
    // Predicated region
    $region14: #{tpu_custom_call.1} parent=1 // pred_check
      _
    $region15: #{tpu_custom_call.1} parent=1 // pred_check_branch
      %42 = sbr.rel (0) target = $region17
    $region16: #{tpu_custom_call.1} parent=1 // pred_region
      %43 = dma.done [#allocation6], 1024
    $region17: #{tpu_custom_call.1} parent=1 // pred_fallthru
      _
    %v45 = vld [vmem:[#allocation2] sm:$0xf]
    %v46 = vld [vmem:[#allocation2 + $0x4] sm:$0xf]
    %v47 = vld [vmem:[#allocation2 + $0x8] sm:$0xf]
    %v48 = vld [vmem:[#allocation2 + $0xc] sm:$0xf]
    %v49 = vld [vmem:[#allocation2 + $0x10] sm:$0xf]
    %v50 = vld [vmem:[#allocation2 + $0x14] sm:$0xf]
    %v51 = vld [vmem:[#allocation2 + $0x18] sm:$0xf]
    %v52 = vld [vmem:[#allocation2 + $0x1c] sm:$0xf]
    %v53 = vld [vmem:[#allocation2 + $0x20] sm:$0xf]
    %v54 = vld [vmem:[#allocation2 + $0x24] sm:$0xf]
    %v55 = vld [vmem:[#allocation2 + $0x28] sm:$0xf]
    %v56 = vld [vmem:[#allocation2 + $0x2c] sm:$0xf]
    %v57 = vld [vmem:[#allocation2 + $0x30] sm:$0xf]
    %v58 = vld [vmem:[#allocation2 + $0x34] sm:$0xf]
    %v59 = vld [vmem:[#allocation2 + $0x38] sm:$0xf]
    %v60 = vld [vmem:[#allocation2 + $0x3c] sm:$0xf]
    %v61 = vld [vmem:[#allocation2 + $0x40] sm:$0xf]
    %v62 = vld [vmem:[#allocation2 + $0x44] sm:$0xf]
    %v63 = vld [vmem:[#allocation2 + $0x48] sm:$0xf]
    %v64 = vld [vmem:[#allocation2 + $0x4c] sm:$0xf]
    %v65 = vld [vmem:[#allocation2 + $0x50] sm:$0xf]
    %v66 = vld [vmem:[#allocation2 + $0x54] sm:$0xf]
    %v67 = vld [vmem:[#allocation2 + $0x58] sm:$0xf]
    %v68 = vld [vmem:[#allocation2 + $0x5c] sm:$0xf]
    %v69 = vld [vmem:[#allocation2 + $0x60] sm:$0xf]
    %v70 = vld [vmem:[#allocation2 + $0x64] sm:$0xf]
    %v71 = vld [vmem:[#allocation2 + $0x68] sm:$0xf]
    %v72 = vld [vmem:[#allocation2 + $0x6c] sm:$0xf]
    %v73 = vld [vmem:[#allocation2 + $0x70] sm:$0xf]
    %v74 = vld [vmem:[#allocation2 + $0x74] sm:$0xf]
    %v75 = vld [vmem:[#allocation2 + $0x78] sm:$0xf]
    %v76 = vld [vmem:[#allocation2 + $0x7c] sm:$0xf]
    %v77 = vld [vmem:[#allocation2 + $0x80] sm:$0xf]
    %v78 = vld [vmem:[#allocation2 + $0x84] sm:$0xf]
    %v79 = vld [vmem:[#allocation2 + $0x88] sm:$0xf]
    %v80 = vld [vmem:[#allocation2 + $0x8c] sm:$0xf]
    %v81 = vld [vmem:[#allocation2 + $0x90] sm:$0xf]
    %v82 = vld [vmem:[#allocation2 + $0x94] sm:$0xf]
    %v83 = vld [vmem:[#allocation2 + $0x98] sm:$0xf]
    %v84 = vld [vmem:[#allocation2 + $0x9c] sm:$0xf]
    %v85 = vld [vmem:[#allocation2 + $0xa0] sm:$0xf]
    %v86 = vld [vmem:[#allocation2 + $0xa4] sm:$0xf]
    %v87 = vld [vmem:[#allocation2 + $0xa8] sm:$0xf]
    %v88 = vld [vmem:[#allocation2 + $0xac] sm:$0xf]
    %v89 = vld [vmem:[#allocation2 + $0xb0] sm:$0xf]
    %v90 = vld [vmem:[#allocation2 + $0xb4] sm:$0xf]
    %v91 = vld [vmem:[#allocation2 + $0xb8] sm:$0xf]
    %v92 = vld [vmem:[#allocation2 + $0xbc] sm:$0xf]
    %v93 = vld [vmem:[#allocation2 + $0xc0] sm:$0xf]
    %v94 = vld [vmem:[#allocation2 + $0xc4] sm:$0xf]
    %v95 = vld [vmem:[#allocation2 + $0xc8] sm:$0xf]
    %v96 = vld [vmem:[#allocation2 + $0xcc] sm:$0xf]
    %v97 = vld [vmem:[#allocation2 + $0xd0] sm:$0xf]
    %v98 = vld [vmem:[#allocation2 + $0xd4] sm:$0xf]
    %v99 = vld [vmem:[#allocation2 + $0xd8] sm:$0xf]
    %v100 = vld [vmem:[#allocation2 + $0xdc] sm:$0xf]
    %v101 = vld [vmem:[#allocation2 + $0xe0] sm:$0xf]
    %v102 = vld [vmem:[#allocation2 + $0xe4] sm:$0xf]
    %v103 = vld [vmem:[#allocation2 + $0xe8] sm:$0xf]
    %v104 = vld [vmem:[#allocation2 + $0xec] sm:$0xf]
    %v105 = vld [vmem:[#allocation2 + $0xf0] sm:$0xf]
    %v106 = vld [vmem:[#allocation2 + $0xf4] sm:$0xf]
    %v107 = vld [vmem:[#allocation2 + $0xf8] sm:$0xf]
    %v108 = vld [vmem:[#allocation2 + $0xfc] sm:$0xf]
    %v109 = vld [vmem:[#allocation5] sm:$0xf]
    %v110 = vld [vmem:[#allocation5 + $0x4] sm:$0xf]
    %v111 = vld [vmem:[#allocation5 + $0x8] sm:$0xf]
    %v112 = vld [vmem:[#allocation5 + $0xc] sm:$0xf]
    %v113 = vld [vmem:[#allocation5 + $0x10] sm:$0xf]
    %v114 = vld [vmem:[#allocation5 + $0x14] sm:$0xf]
    %v115 = vld [vmem:[#allocation5 + $0x18] sm:$0xf]
    %v116 = vld [vmem:[#allocation5 + $0x1c] sm:$0xf]
    %v117 = vld [vmem:[#allocation5 + $0x20] sm:$0xf]
    %v118 = vld [vmem:[#allocation5 + $0x24] sm:$0xf]
    %v119 = vld [vmem:[#allocation5 + $0x28] sm:$0xf]
    %v120 = vld [vmem:[#allocation5 + $0x2c] sm:$0xf]
    %v121 = vld [vmem:[#allocation5 + $0x30] sm:$0xf]
    %v122 = vld [vmem:[#allocation5 + $0x34] sm:$0xf]
    %v123 = vld [vmem:[#allocation5 + $0x38] sm:$0xf]
    %v124 = vld [vmem:[#allocation5 + $0x3c] sm:$0xf]
    %v189 = vunpack.c.l.b16 %v45
    %v190 = vunpack.c.l.b16 %v46
    %v191 = vunpack.c.l.b16 %v47
    %v192 = vunpack.c.l.b16 %v48
    %v193 = vunpack.c.l.b16 %v49
    %v194 = vunpack.c.l.b16 %v50
    %v195 = vunpack.c.l.b16 %v51
    %v196 = vunpack.c.l.b16 %v52
    %v197 = vunpack.c.l.b16 %v53
    %v198 = vunpack.c.l.b16 %v54
    %v199 = vunpack.c.l.b16 %v55
    %v200 = vunpack.c.l.b16 %v56
    %v201 = vunpack.c.l.b16 %v57
    %v202 = vunpack.c.l.b16 %v58
    %v203 = vunpack.c.l.b16 %v59
    %v204 = vunpack.c.l.b16 %v60
    %v205 = vunpack.c.l.b16 %v61
    %v206 = vunpack.c.l.b16 %v62
    %v207 = vunpack.c.l.b16 %v63
    %v208 = vunpack.c.l.b16 %v64
    %v209 = vunpack.c.l.b16 %v65
    %v210 = vunpack.c.l.b16 %v66
    %v211 = vunpack.c.l.b16 %v67
    %v212 = vunpack.c.l.b16 %v68
    %v213 = vunpack.c.l.b16 %v69
    %v214 = vunpack.c.l.b16 %v70
    %v215 = vunpack.c.l.b16 %v71
    %v216 = vunpack.c.l.b16 %v72
    %v217 = vunpack.c.l.b16 %v73
    %v218 = vunpack.c.l.b16 %v74
    %v219 = vunpack.c.l.b16 %v75
    %v220 = vunpack.c.l.b16 %v76
    %v221 = vunpack.c.l.b16 %v77
    %v222 = vunpack.c.l.b16 %v78
    %v223 = vunpack.c.l.b16 %v79
    %v224 = vunpack.c.l.b16 %v80
    %v225 = vunpack.c.l.b16 %v81
    %v226 = vunpack.c.l.b16 %v82
    %v227 = vunpack.c.l.b16 %v83
    %v228 = vunpack.c.l.b16 %v84
    %v229 = vunpack.c.l.b16 %v85
    %v230 = vunpack.c.l.b16 %v86
    %v231 = vunpack.c.l.b16 %v87
    %v232 = vunpack.c.l.b16 %v88
    %v233 = vunpack.c.l.b16 %v89
    %v234 = vunpack.c.l.b16 %v90
    %v235 = vunpack.c.l.b16 %v91
    %v236 = vunpack.c.l.b16 %v92
    %v237 = vunpack.c.l.b16 %v93
    %v238 = vunpack.c.l.b16 %v94
    %v239 = vunpack.c.l.b16 %v95
    %v240 = vunpack.c.l.b16 %v96
    %v241 = vunpack.c.l.b16 %v97
    %v242 = vunpack.c.l.b16 %v98
    %v243 = vunpack.c.l.b16 %v99
    %v244 = vunpack.c.l.b16 %v100
    %v245 = vunpack.c.l.b16 %v101
    %v246 = vunpack.c.l.b16 %v102
    %v247 = vunpack.c.l.b16 %v103
    %v248 = vunpack.c.l.b16 %v104
    %v249 = vunpack.c.l.b16 %v105
    %v250 = vunpack.c.l.b16 %v106
    %v251 = vunpack.c.l.b16 %v107
    %v252 = vunpack.c.l.b16 %v108
    %v253 = vpack.c.b16 %v190, %v189
    %v254 = vpack.c.b16 %v192, %v191
    %v255 = vpack.c.b16 %v194, %v193
    %v256 = vpack.c.b16 %v196, %v195
    %v257 = vpack.c.b16 %v198, %v197
    %v258 = vpack.c.b16 %v200, %v199
    %v259 = vpack.c.b16 %v202, %v201
    %v260 = vpack.c.b16 %v204, %v203
    %v261 = vpack.c.b16 %v206, %v205
    %v262 = vpack.c.b16 %v208, %v207
    %v263 = vpack.c.b16 %v210, %v209
    %v264 = vpack.c.b16 %v212, %v211
    %v265 = vpack.c.b16 %v214, %v213
    %v266 = vpack.c.b16 %v216, %v215
    %v267 = vpack.c.b16 %v218, %v217
    %v268 = vpack.c.b16 %v220, %v219
    %v269 = vpack.c.b16 %v222, %v221
    %v270 = vpack.c.b16 %v224, %v223
    %v271 = vpack.c.b16 %v226, %v225
    %v272 = vpack.c.b16 %v228, %v227
    %v273 = vpack.c.b16 %v230, %v229
    %v274 = vpack.c.b16 %v232, %v231
    %v275 = vpack.c.b16 %v234, %v233
    %v276 = vpack.c.b16 %v236, %v235
    %v277 = vpack.c.b16 %v238, %v237
    %v278 = vpack.c.b16 %v240, %v239
    %v279 = vpack.c.b16 %v242, %v241
    %v280 = vpack.c.b16 %v244, %v243
    %v281 = vpack.c.b16 %v246, %v245
    %v282 = vpack.c.b16 %v248, %v247
    %v283 = vpack.c.b16 %v250, %v249
    %v284 = vpack.c.b16 %v252, %v251
    %v333 = vunpack.c.l.b16 %v109
    %v334 = vunpack.c.l.b16 %v110
    %v335 = vunpack.c.l.b16 %v111
    %v336 = vunpack.c.l.b16 %v112
    %v337 = vunpack.c.l.b16 %v113
    %v338 = vunpack.c.l.b16 %v114
    %v339 = vunpack.c.l.b16 %v115
    %v340 = vunpack.c.l.b16 %v116
    %v341 = vunpack.c.l.b16 %v117
    %v342 = vunpack.c.l.b16 %v118
    %v343 = vunpack.c.l.b16 %v119
    %v344 = vunpack.c.l.b16 %v120
    %v345 = vunpack.c.l.b16 %v121
    %v346 = vunpack.c.l.b16 %v122
    %v347 = vunpack.c.l.b16 %v123
    %v348 = vunpack.c.l.b16 %v124
    %v349 = vpack.c.b16 %v334, %v333
    %v350 = vpack.c.b16 %v336, %v335
    %v351 = vpack.c.b16 %v338, %v337
    %v352 = vpack.c.b16 %v340, %v339
    %v353 = vpack.c.b16 %v342, %v341
    %v354 = vpack.c.b16 %v344, %v343
    %v355 = vpack.c.b16 %v346, %v345
    %v356 = vpack.c.b16 %v348, %v347
    %365 = vmatprep.subr.bf16.mxu0 0
    %366 = vmatpush1.bf16.msra.mxu0 %v356
    %367 = vmatprep.subr.bf16.mxu0 0
    %368 = vmatpush1.bf16.msra.mxu0 %v355
    %369 = vmatprep.subr.bf16.mxu0 0
    %370 = vmatpush1.bf16.msra.mxu0 %v354
    %371 = vmatprep.subr.bf16.mxu0 0
    %372 = vmatpush1.bf16.msra.mxu0 %v353
    %373 = vmatprep.subr.bf16.mxu0 0
    %374 = vmatpush1.bf16.msra.mxu0 %v352
    %375 = vmatprep.subr.bf16.mxu0 0
    %376 = vmatpush1.bf16.msra.mxu0 %v351
    %377 = vmatprep.subr.bf16.mxu0 0
    %378 = vmatpush1.bf16.msra.mxu0 %v350
    %379 = vmatprep.subr.bf16.mxu0 0
    %380 = vmatpush1.bf16.msra.mxu0 %v349
    %381 = vmatprep.subr.bf16.mxu0 0
    %382 = vmatpush2.bf16.msra.mxu0 0
    %383 = vmatprep.subr.bf16.mxu0 0
    %384 = vmatpush2.bf16.msra.mxu0 0
    %385 = vmatprep.subr.bf16.mxu0 0
    %386 = vmatpush2.bf16.msra.mxu0 0
    %387 = vmatprep.subr.bf16.mxu0 0
    %388 = vmatpush2.bf16.msra.mxu0 0
    %389 = vmatprep.subr.bf16.mxu0 0
    %390 = vmatpush2.bf16.msra.mxu0 0
    %391 = vmatprep.subr.bf16.mxu0 0
    %392 = vmatpush2.bf16.msra.mxu0 0
    %393 = vmatprep.subr.bf16.mxu0 0
    %394 = vmatpush2.bf16.msra.mxu0 0
    %395 = vmatprep.subr.bf16.mxu0 0
    %396 = vmatpush2.bf16.msra.mxu0 0
    %397 = vmatprep.mubr.bf16.mxu0 0
    %398 = vmatmul.mubr.bf16.gmra.mxu0 %v253
    %v399 = vpop.f32.mrf.mxu0
    %v400 = vadd.f32 0.0, %v399
    %v401 = vpop.f32.mrf.mxu0
    %v402 = vpop.f32.mrf.mxu0
    %v403 = vadd.f32 0.0, %v402
    %v404 = vpop.f32.mrf.mxu0
    %405 = vmatprep.mubr.bf16.mxu0 0
    %406 = vmatmul.mubr.bf16.gmra.mxu0 %v254
    %v407 = vpop.f32.mrf.mxu0
    %v408 = vadd.f32 0.0, %v407
    %v409 = vpop.f32.mrf.mxu0
    %v410 = vpop.f32.mrf.mxu0
    %v411 = vadd.f32 0.0, %v410
    %v412 = vpop.f32.mrf.mxu0
    %413 = vmatprep.mubr.bf16.mxu0 0
    %414 = vmatmul.mubr.bf16.gmra.mxu0 %v255
    %v415 = vpop.f32.mrf.mxu0
    %v416 = vadd.f32 0.0, %v415
    %v417 = vpop.f32.mrf.mxu0
    %v418 = vpop.f32.mrf.mxu0
    %v419 = vadd.f32 0.0, %v418
    %v420 = vpop.f32.mrf.mxu0
    %421 = vmatprep.mubr.bf16.mxu0 0
    %422 = vmatmul.mubr.bf16.gmra.mxu0 %v256
    %v423 = vpop.f32.mrf.mxu0
    %v424 = vadd.f32 0.0, %v423
    %v425 = vpop.f32.mrf.mxu0
    %v426 = vpop.f32.mrf.mxu0
    %v427 = vadd.f32 0.0, %v426
    %v428 = vpop.f32.mrf.mxu0
    %429 = vmatprep.mubr.bf16.mxu0 0
    %430 = vmatmul.mubr.bf16.gmra.mxu0 %v257
    %v431 = vpop.f32.mrf.mxu0
    %v432 = vadd.f32 0.0, %v431
    %v433 = vpop.f32.mrf.mxu0
    %v434 = vpop.f32.mrf.mxu0
    %v435 = vadd.f32 0.0, %v434
    %v436 = vpop.f32.mrf.mxu0
    %437 = vmatprep.mubr.bf16.mxu0 0
    %438 = vmatmul.mubr.bf16.gmra.mxu0 %v258
    %v439 = vpop.f32.mrf.mxu0
    %v440 = vadd.f32 0.0, %v439
    %v441 = vpop.f32.mrf.mxu0
    %v442 = vpop.f32.mrf.mxu0
    %v443 = vadd.f32 0.0, %v442
    %v444 = vpop.f32.mrf.mxu0
    %445 = vmatprep.mubr.bf16.mxu0 0
    %446 = vmatmul.mubr.bf16.gmra.mxu0 %v259
    %v447 = vpop.f32.mrf.mxu0
    %v448 = vadd.f32 0.0, %v447
    %v449 = vpop.f32.mrf.mxu0
    %v450 = vpop.f32.mrf.mxu0
    %v451 = vadd.f32 0.0, %v450
    %v452 = vpop.f32.mrf.mxu0
    %453 = vmatprep.mubr.bf16.mxu0 0
    %454 = vmatmul.mubr.bf16.gmra.mxu0 %v260
    %v455 = vpop.f32.mrf.mxu0
    %v456 = vadd.f32 0.0, %v455
    %v457 = vpop.f32.mrf.mxu0
    %v458 = vpop.f32.mrf.mxu0
    %v459 = vadd.f32 0.0, %v458
    %v460 = vpop.f32.mrf.mxu0
    %461 = vmatprep.mubr.bf16.mxu0 0
    %462 = vmatmul.mubr.bf16.gmra.mxu0 %v261
    %v463 = vpop.f32.mrf.mxu0
    %v464 = vadd.f32 0.0, %v463
    %v465 = vpop.f32.mrf.mxu0
    %v466 = vpop.f32.mrf.mxu0
    %v467 = vadd.f32 0.0, %v466
    %v468 = vpop.f32.mrf.mxu0
    %469 = vmatprep.mubr.bf16.mxu0 0
    %470 = vmatmul.mubr.bf16.gmra.mxu0 %v262
    %v471 = vpop.f32.mrf.mxu0
    %v472 = vadd.f32 0.0, %v471
    %v473 = vpop.f32.mrf.mxu0
    %v474 = vpop.f32.mrf.mxu0
    %v475 = vadd.f32 0.0, %v474
    %v476 = vpop.f32.mrf.mxu0
    %477 = vmatprep.mubr.bf16.mxu0 0
    %478 = vmatmul.mubr.bf16.gmra.mxu0 %v263
    %v479 = vpop.f32.mrf.mxu0
    %v480 = vadd.f32 0.0, %v479
    %v481 = vpop.f32.mrf.mxu0
    %v482 = vpop.f32.mrf.mxu0
    %v483 = vadd.f32 0.0, %v482
    %v484 = vpop.f32.mrf.mxu0
    %485 = vmatprep.mubr.bf16.mxu0 0
    %486 = vmatmul.mubr.bf16.gmra.mxu0 %v264
    %v487 = vpop.f32.mrf.mxu0
    %v488 = vadd.f32 0.0, %v487
    %v489 = vpop.f32.mrf.mxu0
    %v490 = vpop.f32.mrf.mxu0
    %v491 = vadd.f32 0.0, %v490
    %v492 = vpop.f32.mrf.mxu0
    %493 = vmatprep.mubr.bf16.mxu0 0
    %494 = vmatmul.mubr.bf16.gmra.mxu0 %v265
    %v495 = vpop.f32.mrf.mxu0
    %v496 = vadd.f32 0.0, %v495
    %v497 = vpop.f32.mrf.mxu0
    %v498 = vpop.f32.mrf.mxu0
    %v499 = vadd.f32 0.0, %v498
    %v500 = vpop.f32.mrf.mxu0
    %501 = vmatprep.mubr.bf16.mxu0 0
    %502 = vmatmul.mubr.bf16.gmra.mxu0 %v266
    %v503 = vpop.f32.mrf.mxu0
    %v504 = vadd.f32 0.0, %v503
    %v505 = vpop.f32.mrf.mxu0
    %v506 = vpop.f32.mrf.mxu0
    %v507 = vadd.f32 0.0, %v506
    %v508 = vpop.f32.mrf.mxu0
    %509 = vmatprep.mubr.bf16.mxu0 0
    %510 = vmatmul.mubr.bf16.gmra.mxu0 %v267
    %v511 = vpop.f32.mrf.mxu0
    %v512 = vadd.f32 0.0, %v511
    %v513 = vpop.f32.mrf.mxu0
    %v514 = vpop.f32.mrf.mxu0
    %v515 = vadd.f32 0.0, %v514
    %v516 = vpop.f32.mrf.mxu0
    %517 = vmatprep.mubr.bf16.mxu0 0
    %518 = vmatmul.mubr.bf16.gmra.mxu0 %v268
    %v519 = vpop.f32.mrf.mxu0
    %v520 = vadd.f32 0.0, %v519
    %v521 = vpop.f32.mrf.mxu0
    %v522 = vpop.f32.mrf.mxu0
    %v523 = vadd.f32 0.0, %v522
    %v524 = vpop.f32.mrf.mxu0
    %525 = vmatprep.mubr.bf16.mxu0 0
    %526 = vmatmul.mubr.bf16.gmra.mxu0 %v269
    %v527 = vpop.f32.mrf.mxu0
    %v528 = vadd.f32 0.0, %v527
    %v529 = vpop.f32.mrf.mxu0
    %v530 = vpop.f32.mrf.mxu0
    %v531 = vadd.f32 0.0, %v530
    %v532 = vpop.f32.mrf.mxu0
    %533 = vmatprep.mubr.bf16.mxu0 0
    %534 = vmatmul.mubr.bf16.gmra.mxu0 %v270
    %v535 = vpop.f32.mrf.mxu0
    %v536 = vadd.f32 0.0, %v535
    %v537 = vpop.f32.mrf.mxu0
    %v538 = vpop.f32.mrf.mxu0
    %v539 = vadd.f32 0.0, %v538
    %v540 = vpop.f32.mrf.mxu0
    %541 = vmatprep.mubr.bf16.mxu0 0
    %542 = vmatmul.mubr.bf16.gmra.mxu0 %v271
    %v543 = vpop.f32.mrf.mxu0
    %v544 = vadd.f32 0.0, %v543
    %v545 = vpop.f32.mrf.mxu0
    %v546 = vpop.f32.mrf.mxu0
    %v547 = vadd.f32 0.0, %v546
    %v548 = vpop.f32.mrf.mxu0
    %549 = vmatprep.mubr.bf16.mxu0 0
    %550 = vmatmul.mubr.bf16.gmra.mxu0 %v272
    %v551 = vpop.f32.mrf.mxu0
    %v552 = vadd.f32 0.0, %v551
    %v553 = vpop.f32.mrf.mxu0
    %v554 = vpop.f32.mrf.mxu0
    %v555 = vadd.f32 0.0, %v554
    %v556 = vpop.f32.mrf.mxu0
    %557 = vmatprep.mubr.bf16.mxu0 0
    %558 = vmatmul.mubr.bf16.gmra.mxu0 %v273
    %v559 = vpop.f32.mrf.mxu0
    %v560 = vadd.f32 0.0, %v559
    %v561 = vpop.f32.mrf.mxu0
    %v562 = vpop.f32.mrf.mxu0
    %v563 = vadd.f32 0.0, %v562
    %v564 = vpop.f32.mrf.mxu0
    %565 = vmatprep.mubr.bf16.mxu0 0
    %566 = vmatmul.mubr.bf16.gmra.mxu0 %v274
    %v567 = vpop.f32.mrf.mxu0
    %v568 = vadd.f32 0.0, %v567
    %v569 = vpop.f32.mrf.mxu0
    %v570 = vpop.f32.mrf.mxu0
    %v571 = vadd.f32 0.0, %v570
    %v572 = vpop.f32.mrf.mxu0
    %573 = vmatprep.mubr.bf16.mxu0 0
    %574 = vmatmul.mubr.bf16.gmra.mxu0 %v275
    %v575 = vpop.f32.mrf.mxu0
    %v576 = vadd.f32 0.0, %v575
    %v577 = vpop.f32.mrf.mxu0
    %v578 = vpop.f32.mrf.mxu0
    %v579 = vadd.f32 0.0, %v578
    %v580 = vpop.f32.mrf.mxu0
    %581 = vmatprep.mubr.bf16.mxu0 0
    %582 = vmatmul.mubr.bf16.gmra.mxu0 %v276
    %v583 = vpop.f32.mrf.mxu0
    %v584 = vadd.f32 0.0, %v583
    %v585 = vpop.f32.mrf.mxu0
    %v586 = vpop.f32.mrf.mxu0
    %v587 = vadd.f32 0.0, %v586
    %v588 = vpop.f32.mrf.mxu0
    %589 = vmatprep.mubr.bf16.mxu0 0
    %590 = vmatmul.mubr.bf16.gmra.mxu0 %v277
    %v591 = vpop.f32.mrf.mxu0
    %v592 = vadd.f32 0.0, %v591
    %v593 = vpop.f32.mrf.mxu0
    %v594 = vpop.f32.mrf.mxu0
    %v595 = vadd.f32 0.0, %v594
    %v596 = vpop.f32.mrf.mxu0
    %597 = vmatprep.mubr.bf16.mxu0 0
    %598 = vmatmul.mubr.bf16.gmra.mxu0 %v278
    %v599 = vpop.f32.mrf.mxu0
    %v600 = vadd.f32 0.0, %v599
    %v601 = vpop.f32.mrf.mxu0
    %v602 = vpop.f32.mrf.mxu0
    %v603 = vadd.f32 0.0, %v602
    %v604 = vpop.f32.mrf.mxu0
    %605 = vmatprep.mubr.bf16.mxu0 0
    %606 = vmatmul.mubr.bf16.gmra.mxu0 %v279
    %v607 = vpop.f32.mrf.mxu0
    %v608 = vadd.f32 0.0, %v607
    %v609 = vpop.f32.mrf.mxu0
    %v610 = vpop.f32.mrf.mxu0
    %v611 = vadd.f32 0.0, %v610
    %v612 = vpop.f32.mrf.mxu0
    %613 = vmatprep.mubr.bf16.mxu0 0
    %614 = vmatmul.mubr.bf16.gmra.mxu0 %v280
    %v615 = vpop.f32.mrf.mxu0
    %v616 = vadd.f32 0.0, %v615
    %v617 = vpop.f32.mrf.mxu0
    %v618 = vpop.f32.mrf.mxu0
    %v619 = vadd.f32 0.0, %v618
    %v620 = vpop.f32.mrf.mxu0
    %621 = vmatprep.mubr.bf16.mxu0 0
    %622 = vmatmul.mubr.bf16.gmra.mxu0 %v281
    %v623 = vpop.f32.mrf.mxu0
    %v624 = vadd.f32 0.0, %v623
    %v625 = vpop.f32.mrf.mxu0
    %v626 = vpop.f32.mrf.mxu0
    %v627 = vadd.f32 0.0, %v626
    %v628 = vpop.f32.mrf.mxu0
    %629 = vmatprep.mubr.bf16.mxu0 0
    %630 = vmatmul.mubr.bf16.gmra.mxu0 %v282
    %v631 = vpop.f32.mrf.mxu0
    %v632 = vadd.f32 0.0, %v631
    %v633 = vpop.f32.mrf.mxu0
    %v634 = vpop.f32.mrf.mxu0
    %v635 = vadd.f32 0.0, %v634
    %v636 = vpop.f32.mrf.mxu0
    %637 = vmatprep.mubr.bf16.mxu0 0
    %638 = vmatmul.mubr.bf16.gmra.mxu0 %v283
    %v639 = vpop.f32.mrf.mxu0
    %v640 = vadd.f32 0.0, %v639
    %v641 = vpop.f32.mrf.mxu0
    %v642 = vpop.f32.mrf.mxu0
    %v643 = vadd.f32 0.0, %v642
    %v644 = vpop.f32.mrf.mxu0
    %645 = vmatprep.mubr.bf16.mxu0 0
    %646 = vmatmul.mubr.bf16.gmra.mxu0 %v284
    %v647 = vpop.f32.mrf.mxu0
    %v648 = vadd.f32 0.0, %v647
    %v649 = vpop.f32.mrf.mxu0
    %v650 = vpop.f32.mrf.mxu0
    %v651 = vadd.f32 0.0, %v650
    %v652 = vpop.f32.mrf.mxu0
    %653 = vdwg.mxu0
    %v654 = vpack.c.bf16 %v403, %v400
    %v655 = vpack.c.bf16 %v411, %v408
    %v656 = vpack.c.bf16 %v419, %v416
    %v657 = vpack.c.bf16 %v427, %v424
    %v658 = vpack.c.bf16 %v435, %v432
    %v659 = vpack.c.bf16 %v443, %v440
    %v660 = vpack.c.bf16 %v451, %v448
    %v661 = vpack.c.bf16 %v459, %v456
    %v662 = vpack.c.bf16 %v467, %v464
    %v663 = vpack.c.bf16 %v475, %v472
    %v664 = vpack.c.bf16 %v483, %v480
    %v665 = vpack.c.bf16 %v491, %v488
    %v666 = vpack.c.bf16 %v499, %v496
    %v667 = vpack.c.bf16 %v507, %v504
    %v668 = vpack.c.bf16 %v515, %v512
    %v669 = vpack.c.bf16 %v523, %v520
    %v670 = vpack.c.bf16 %v531, %v528
    %v671 = vpack.c.bf16 %v539, %v536
    %v672 = vpack.c.bf16 %v547, %v544
    %v673 = vpack.c.bf16 %v555, %v552
    %v674 = vpack.c.bf16 %v563, %v560
    %v675 = vpack.c.bf16 %v571, %v568
    %v676 = vpack.c.bf16 %v579, %v576
    %v677 = vpack.c.bf16 %v587, %v584
    %v678 = vpack.c.bf16 %v595, %v592
    %v679 = vpack.c.bf16 %v603, %v600
    %v680 = vpack.c.bf16 %v611, %v608
    %v681 = vpack.c.bf16 %v619, %v616
    %v682 = vpack.c.bf16 %v627, %v624
    %v683 = vpack.c.bf16 %v635, %v632
    %v684 = vpack.c.bf16 %v643, %v640
    %v685 = vpack.c.bf16 %v651, %v648
    %v718 = vunpack.c.l.b16 %v654
    %v719 = vunpack.c.h.b16 %v654
    %v720 = vunpack.c.l.b16 %v655
    %v721 = vunpack.c.h.b16 %v655
    %v722 = vunpack.c.l.b16 %v656
    %v723 = vunpack.c.h.b16 %v656
    %v724 = vunpack.c.l.b16 %v657
    %v725 = vunpack.c.h.b16 %v657
    %v726 = vunpack.c.l.b16 %v658
    %v727 = vunpack.c.h.b16 %v658
    %v728 = vunpack.c.l.b16 %v659
    %v729 = vunpack.c.h.b16 %v659
    %v730 = vunpack.c.l.b16 %v660
    %v731 = vunpack.c.h.b16 %v660
    %v732 = vunpack.c.l.b16 %v661
    %v733 = vunpack.c.h.b16 %v661
    %v734 = vunpack.c.l.b16 %v662
    %v735 = vunpack.c.h.b16 %v662
    %v736 = vunpack.c.l.b16 %v663
    %v737 = vunpack.c.h.b16 %v663
    %v738 = vunpack.c.l.b16 %v664
    %v739 = vunpack.c.h.b16 %v664
    %v740 = vunpack.c.l.b16 %v665
    %v741 = vunpack.c.h.b16 %v665
    %v742 = vunpack.c.l.b16 %v666
    %v743 = vunpack.c.h.b16 %v666
    %v744 = vunpack.c.l.b16 %v667
    %v745 = vunpack.c.h.b16 %v667
    %v746 = vunpack.c.l.b16 %v668
    %v747 = vunpack.c.h.b16 %v668
    %v748 = vunpack.c.l.b16 %v669
    %v749 = vunpack.c.h.b16 %v669
    %v750 = vunpack.c.l.b16 %v670
    %v751 = vunpack.c.h.b16 %v670
    %v752 = vunpack.c.l.b16 %v671
    %v753 = vunpack.c.h.b16 %v671
    %v754 = vunpack.c.l.b16 %v672
    %v755 = vunpack.c.h.b16 %v672
    %v756 = vunpack.c.l.b16 %v673
    %v757 = vunpack.c.h.b16 %v673
    %v758 = vunpack.c.l.b16 %v674
    %v759 = vunpack.c.h.b16 %v674
    %v760 = vunpack.c.l.b16 %v675
    %v761 = vunpack.c.h.b16 %v675
    %v762 = vunpack.c.l.b16 %v676
    %v763 = vunpack.c.h.b16 %v676
    %v764 = vunpack.c.l.b16 %v677
    %v765 = vunpack.c.h.b16 %v677
    %v766 = vunpack.c.l.b16 %v678
    %v767 = vunpack.c.h.b16 %v678
    %v768 = vunpack.c.l.b16 %v679
    %v769 = vunpack.c.h.b16 %v679
    %v770 = vunpack.c.l.b16 %v680
    %v771 = vunpack.c.h.b16 %v680
    %v772 = vunpack.c.l.b16 %v681
    %v773 = vunpack.c.h.b16 %v681
    %v774 = vunpack.c.l.b16 %v682
    %v775 = vunpack.c.h.b16 %v682
    %v776 = vunpack.c.l.b16 %v683
    %v777 = vunpack.c.h.b16 %v683
    %v778 = vunpack.c.l.b16 %v684
    %v779 = vunpack.c.h.b16 %v684
    %v780 = vunpack.c.l.b16 %v685
    %v781 = vunpack.c.h.b16 %v685
    %v782 = vpack.c.b16 %v718, %v718
    %v783 = vpack.c.b16 %v719, %v719
    %v784 = vpack.c.b16 %v720, %v720
    %v785 = vpack.c.b16 %v721, %v721
    %v786 = vpack.c.b16 %v722, %v722
    %v787 = vpack.c.b16 %v723, %v723
    %v788 = vpack.c.b16 %v724, %v724
    %v789 = vpack.c.b16 %v725, %v725
    %v790 = vpack.c.b16 %v726, %v726
    %v791 = vpack.c.b16 %v727, %v727
    %v792 = vpack.c.b16 %v728, %v728
    %v793 = vpack.c.b16 %v729, %v729
    %v794 = vpack.c.b16 %v730, %v730
    %v795 = vpack.c.b16 %v731, %v731
    %v796 = vpack.c.b16 %v732, %v732
    %v797 = vpack.c.b16 %v733, %v733
    %v798 = vpack.c.b16 %v734, %v734
    %v799 = vpack.c.b16 %v735, %v735
    %v800 = vpack.c.b16 %v736, %v736
    %v801 = vpack.c.b16 %v737, %v737
    %v802 = vpack.c.b16 %v738, %v738
    %v803 = vpack.c.b16 %v739, %v739
    %v804 = vpack.c.b16 %v740, %v740
    %v805 = vpack.c.b16 %v741, %v741
    %v806 = vpack.c.b16 %v742, %v742
    %v807 = vpack.c.b16 %v743, %v743
    %v808 = vpack.c.b16 %v744, %v744
    %v809 = vpack.c.b16 %v745, %v745
    %v810 = vpack.c.b16 %v746, %v746
    %v811 = vpack.c.b16 %v747, %v747
    %v812 = vpack.c.b16 %v748, %v748
    %v813 = vpack.c.b16 %v749, %v749
    %v814 = vpack.c.b16 %v750, %v750
    %v815 = vpack.c.b16 %v751, %v751
    %v816 = vpack.c.b16 %v752, %v752
    %v817 = vpack.c.b16 %v753, %v753
    %v818 = vpack.c.b16 %v754, %v754
    %v819 = vpack.c.b16 %v755, %v755
    %v820 = vpack.c.b16 %v756, %v756
    %v821 = vpack.c.b16 %v757, %v757
    %v822 = vpack.c.b16 %v758, %v758
    %v823 = vpack.c.b16 %v759, %v759
    %v824 = vpack.c.b16 %v760, %v760
    %v825 = vpack.c.b16 %v761, %v761
    %v826 = vpack.c.b16 %v762, %v762
    %v827 = vpack.c.b16 %v763, %v763
    %v828 = vpack.c.b16 %v764, %v764
    %v829 = vpack.c.b16 %v765, %v765
    %v830 = vpack.c.b16 %v766, %v766
    %v831 = vpack.c.b16 %v767, %v767
    %v832 = vpack.c.b16 %v768, %v768
    %v833 = vpack.c.b16 %v769, %v769
    %v834 = vpack.c.b16 %v770, %v770
    %v835 = vpack.c.b16 %v771, %v771
    %v836 = vpack.c.b16 %v772, %v772
    %v837 = vpack.c.b16 %v773, %v773
    %v838 = vpack.c.b16 %v774, %v774
    %v839 = vpack.c.b16 %v775, %v775
    %v840 = vpack.c.b16 %v776, %v776
    %v841 = vpack.c.b16 %v777, %v777
    %v842 = vpack.c.b16 %v778, %v778
    %v843 = vpack.c.b16 %v779, %v779
    %v844 = vpack.c.b16 %v780, %v780
    %v845 = vpack.c.b16 %v781, %v781
    %910 = vst [vmem:[#allocation7] sm:$0xf] %v782
    %911 = vst [vmem:[#allocation7 + $0x4] sm:$0xf] %v783
    %912 = vst [vmem:[#allocation7 + $0x8] sm:$0xf] %v784
    %913 = vst [vmem:[#allocation7 + $0xc] sm:$0xf] %v785
    %914 = vst [vmem:[#allocation7 + $0x10] sm:$0xf] %v786
    %915 = vst [vmem:[#allocation7 + $0x14] sm:$0xf] %v787
    %916 = vst [vmem:[#allocation7 + $0x18] sm:$0xf] %v788
    %917 = vst [vmem:[#allocation7 + $0x1c] sm:$0xf] %v789
    %918 = vst [vmem:[#allocation7 + $0x20] sm:$0xf] %v790
    %919 = vst [vmem:[#allocation7 + $0x24] sm:$0xf] %v791
    %920 = vst [vmem:[#allocation7 + $0x28] sm:$0xf] %v792
    %921 = vst [vmem:[#allocation7 + $0x2c] sm:$0xf] %v793
    %922 = vst [vmem:[#allocation7 + $0x30] sm:$0xf] %v794
    %923 = vst [vmem:[#allocation7 + $0x34] sm:$0xf] %v795
    %924 = vst [vmem:[#allocation7 + $0x38] sm:$0xf] %v796
    %925 = vst [vmem:[#allocation7 + $0x3c] sm:$0xf] %v797
    %926 = vst [vmem:[#allocation7 + $0x40] sm:$0xf] %v798
    %927 = vst [vmem:[#allocation7 + $0x44] sm:$0xf] %v799
    %928 = vst [vmem:[#allocation7 + $0x48] sm:$0xf] %v800
    %929 = vst [vmem:[#allocation7 + $0x4c] sm:$0xf] %v801
    %930 = vst [vmem:[#allocation7 + $0x50] sm:$0xf] %v802
    %931 = vst [vmem:[#allocation7 + $0x54] sm:$0xf] %v803
    %932 = vst [vmem:[#allocation7 + $0x58] sm:$0xf] %v804
    %933 = vst [vmem:[#allocation7 + $0x5c] sm:$0xf] %v805
    %934 = vst [vmem:[#allocation7 + $0x60] sm:$0xf] %v806
    %935 = vst [vmem:[#allocation7 + $0x64] sm:$0xf] %v807
    %936 = vst [vmem:[#allocation7 + $0x68] sm:$0xf] %v808
    %937 = vst [vmem:[#allocation7 + $0x6c] sm:$0xf] %v809
    %938 = vst [vmem:[#allocation7 + $0x70] sm:$0xf] %v810
    %939 = vst [vmem:[#allocation7 + $0x74] sm:$0xf] %v811
    %940 = vst [vmem:[#allocation7 + $0x78] sm:$0xf] %v812
    %941 = vst [vmem:[#allocation7 + $0x7c] sm:$0xf] %v813
    %942 = vst [vmem:[#allocation7 + $0x80] sm:$0xf] %v814
    %943 = vst [vmem:[#allocation7 + $0x84] sm:$0xf] %v815
    %944 = vst [vmem:[#allocation7 + $0x88] sm:$0xf] %v816
    %945 = vst [vmem:[#allocation7 + $0x8c] sm:$0xf] %v817
    %946 = vst [vmem:[#allocation7 + $0x90] sm:$0xf] %v818
    %947 = vst [vmem:[#allocation7 + $0x94] sm:$0xf] %v819
    %948 = vst [vmem:[#allocation7 + $0x98] sm:$0xf] %v820
    %949 = vst [vmem:[#allocation7 + $0x9c] sm:$0xf] %v821
    %950 = vst [vmem:[#allocation7 + $0xa0] sm:$0xf] %v822
    %951 = vst [vmem:[#allocation7 + $0xa4] sm:$0xf] %v823
    %952 = vst [vmem:[#allocation7 + $0xa8] sm:$0xf] %v824
    %953 = vst [vmem:[#allocation7 + $0xac] sm:$0xf] %v825
    %954 = vst [vmem:[#allocation7 + $0xb0] sm:$0xf] %v826
    %955 = vst [vmem:[#allocation7 + $0xb4] sm:$0xf] %v827
    %956 = vst [vmem:[#allocation7 + $0xb8] sm:$0xf] %v828
    %957 = vst [vmem:[#allocation7 + $0xbc] sm:$0xf] %v829
    %958 = vst [vmem:[#allocation7 + $0xc0] sm:$0xf] %v830
    %959 = vst [vmem:[#allocation7 + $0xc4] sm:$0xf] %v831
    %960 = vst [vmem:[#allocation7 + $0xc8] sm:$0xf] %v832
    %961 = vst [vmem:[#allocation7 + $0xcc] sm:$0xf] %v833
    %962 = vst [vmem:[#allocation7 + $0xd0] sm:$0xf] %v834
    %963 = vst [vmem:[#allocation7 + $0xd4] sm:$0xf] %v835
    %964 = vst [vmem:[#allocation7 + $0xd8] sm:$0xf] %v836
    %965 = vst [vmem:[#allocation7 + $0xdc] sm:$0xf] %v837
    %966 = vst [vmem:[#allocation7 + $0xe0] sm:$0xf] %v838
    %967 = vst [vmem:[#allocation7 + $0xe4] sm:$0xf] %v839
    %968 = vst [vmem:[#allocation7 + $0xe8] sm:$0xf] %v840
    %969 = vst [vmem:[#allocation7 + $0xec] sm:$0xf] %v841
    %970 = vst [vmem:[#allocation7 + $0xf0] sm:$0xf] %v842
    %971 = vst [vmem:[#allocation7 + $0xf4] sm:$0xf] %v843
    %972 = vst [vmem:[#allocation7 + $0xf8] sm:$0xf] %v844
    %973 = vst [vmem:[#allocation7 + $0xfc] sm:$0xf] %v845
    %v974 = vadd.f32 %v400, %v403
    %v975 = vadd.f32 %v974, %v408
    %v976 = vadd.f32 %v975, %v411
    %v977 = vadd.f32 %v976, %v416
    %v978 = vadd.f32 %v977, %v419
    %v979 = vadd.f32 %v978, %v424
    %v980 = vadd.f32 %v979, %v427
    %v981 = vadd.f32 %v980, %v432
    %v982 = vadd.f32 %v981, %v435
    %v983 = vadd.f32 %v982, %v440
    %v984 = vadd.f32 %v983, %v443
    %v985 = vadd.f32 %v984, %v448
    %v986 = vadd.f32 %v985, %v451
    %v987 = vadd.f32 %v986, %v456
    %v988 = vadd.f32 %v987, %v459
    %v989 = vadd.f32 %v988, %v464
    %v990 = vadd.f32 %v989, %v467
    %v991 = vadd.f32 %v990, %v472
    %v992 = vadd.f32 %v991, %v475
    %v993 = vadd.f32 %v992, %v480
    %v994 = vadd.f32 %v993, %v483
    %v995 = vadd.f32 %v994, %v488
    %v996 = vadd.f32 %v995, %v491
    %v997 = vadd.f32 %v996, %v496
    %v998 = vadd.f32 %v997, %v499
    %v999 = vadd.f32 %v998, %v504
    %v1000 = vadd.f32 %v999, %v507
    %v1001 = vadd.f32 %v1000, %v512
    %v1002 = vadd.f32 %v1001, %v515
    %v1003 = vadd.f32 %v1002, %v520
    %v1004 = vadd.f32 %v1003, %v523
    %v1005 = vadd.f32 %v1004, %v528
    %v1006 = vadd.f32 %v1005, %v531
    %v1007 = vadd.f32 %v1006, %v536
    %v1008 = vadd.f32 %v1007, %v539
    %v1009 = vadd.f32 %v1008, %v544
    %v1010 = vadd.f32 %v1009, %v547
    %v1011 = vadd.f32 %v1010, %v552
    %v1012 = vadd.f32 %v1011, %v555
    %v1013 = vadd.f32 %v1012, %v560
    %v1014 = vadd.f32 %v1013, %v563
    %v1015 = vadd.f32 %v1014, %v568
    %v1016 = vadd.f32 %v1015, %v571
    %v1017 = vadd.f32 %v1016, %v576
    %v1018 = vadd.f32 %v1017, %v579
    %v1019 = vadd.f32 %v1018, %v584
    %v1020 = vadd.f32 %v1019, %v587
    %v1021 = vadd.f32 %v1020, %v592
    %v1022 = vadd.f32 %v1021, %v595
    %v1023 = vadd.f32 %v1022, %v600
    %v1024 = vadd.f32 %v1023, %v603
    %v1025 = vadd.f32 %v1024, %v608
    %v1026 = vadd.f32 %v1025, %v611
    %v1027 = vadd.f32 %v1026, %v616
    %v1028 = vadd.f32 %v1027, %v619
    %v1029 = vadd.f32 %v1028, %v624
    %v1030 = vadd.f32 %v1029, %v627
    %v1031 = vadd.f32 %v1030, %v632
    %v1032 = vadd.f32 %v1031, %v635
    %v1033 = vadd.f32 %v1032, %v640
    %v1034 = vadd.f32 %v1033, %v643
    %v1035 = vadd.f32 %v1034, %v648
    %v1036 = vadd.f32 %v1035, %v651
    %v1037 = vrot.slane %v1036, 4
    %v1038 = vadd.f32 %v1036, %v1037
    %v1039 = vrot.slane %v1038, 2
    %v1040 = vadd.f32 %v1038, %v1039
    %v1041 = vrot.slane %v1040, 1
    %v1042 = vadd.f32 %v1040, %v1041
    %1043 = vst [vmem:[#allocation8] sm:$0x1] %v1042
    %v1044 = vmul.f32 %v400, %v400
    %v1045 = vmul.f32 %v403, %v403
    %v1046 = vmul.f32 %v408, %v408
    %v1047 = vmul.f32 %v411, %v411
    %v1048 = vmul.f32 %v416, %v416
    %v1049 = vmul.f32 %v419, %v419
    %v1050 = vmul.f32 %v424, %v424
    %v1051 = vmul.f32 %v427, %v427
    %v1052 = vmul.f32 %v432, %v432
    %v1053 = vmul.f32 %v435, %v435
    %v1054 = vmul.f32 %v440, %v440
    %v1055 = vmul.f32 %v443, %v443
    %v1056 = vmul.f32 %v448, %v448
    %v1057 = vmul.f32 %v451, %v451
    %v1058 = vmul.f32 %v456, %v456
    %v1059 = vmul.f32 %v459, %v459
    %v1060 = vmul.f32 %v464, %v464
    %v1061 = vmul.f32 %v467, %v467
    %v1062 = vmul.f32 %v472, %v472
    %v1063 = vmul.f32 %v475, %v475
    %v1064 = vmul.f32 %v480, %v480
    %v1065 = vmul.f32 %v483, %v483
    %v1066 = vmul.f32 %v488, %v488
    %v1067 = vmul.f32 %v491, %v491
    %v1068 = vmul.f32 %v496, %v496
    %v1069 = vmul.f32 %v499, %v499
    %v1070 = vmul.f32 %v504, %v504
    %v1071 = vmul.f32 %v507, %v507
    %v1072 = vmul.f32 %v512, %v512
    %v1073 = vmul.f32 %v515, %v515
    %v1074 = vmul.f32 %v520, %v520
    %v1075 = vmul.f32 %v523, %v523
    %v1076 = vmul.f32 %v528, %v528
    %v1077 = vmul.f32 %v531, %v531
    %v1078 = vmul.f32 %v536, %v536
    %v1079 = vmul.f32 %v539, %v539
    %v1080 = vmul.f32 %v544, %v544
    %v1081 = vmul.f32 %v547, %v547
    %v1082 = vmul.f32 %v552, %v552
    %v1083 = vmul.f32 %v555, %v555
    %v1084 = vmul.f32 %v560, %v560
    %v1085 = vmul.f32 %v563, %v563
    %v1086 = vmul.f32 %v568, %v568
    %v1087 = vmul.f32 %v571, %v571
    %v1088 = vmul.f32 %v576, %v576
    %v1089 = vmul.f32 %v579, %v579
    %v1090 = vmul.f32 %v584, %v584
    %v1091 = vmul.f32 %v587, %v587
    %v1092 = vmul.f32 %v592, %v592
    %v1093 = vmul.f32 %v595, %v595
    %v1094 = vmul.f32 %v600, %v600
    %v1095 = vmul.f32 %v603, %v603
    %v1096 = vmul.f32 %v608, %v608
    %v1097 = vmul.f32 %v611, %v611
    %v1098 = vmul.f32 %v616, %v616
    %v1099 = vmul.f32 %v619, %v619
    %v1100 = vmul.f32 %v624, %v624
    %v1101 = vmul.f32 %v627, %v627
    %v1102 = vmul.f32 %v632, %v632
    %v1103 = vmul.f32 %v635, %v635
    %v1104 = vmul.f32 %v640, %v640
    %v1105 = vmul.f32 %v643, %v643
    %v1106 = vmul.f32 %v648, %v648
    %v1107 = vmul.f32 %v651, %v651
    %v1108 = vadd.f32 %v1044, %v1045
    %v1109 = vadd.f32 %v1108, %v1046
    %v1110 = vadd.f32 %v1109, %v1047
    %v1111 = vadd.f32 %v1110, %v1048
    %v1112 = vadd.f32 %v1111, %v1049
    %v1113 = vadd.f32 %v1112, %v1050
    %v1114 = vadd.f32 %v1113, %v1051
    %v1115 = vadd.f32 %v1114, %v1052
    %v1116 = vadd.f32 %v1115, %v1053
    %v1117 = vadd.f32 %v1116, %v1054
    %v1118 = vadd.f32 %v1117, %v1055
    %v1119 = vadd.f32 %v1118, %v1056
    %v1120 = vadd.f32 %v1119, %v1057
    %v1121 = vadd.f32 %v1120, %v1058
    %v1122 = vadd.f32 %v1121, %v1059
    %v1123 = vadd.f32 %v1122, %v1060
    %v1124 = vadd.f32 %v1123, %v1061
    %v1125 = vadd.f32 %v1124, %v1062
    %v1126 = vadd.f32 %v1125, %v1063
    %v1127 = vadd.f32 %v1126, %v1064
    %v1128 = vadd.f32 %v1127, %v1065
    %v1129 = vadd.f32 %v1128, %v1066
    %v1130 = vadd.f32 %v1129, %v1067
    %v1131 = vadd.f32 %v1130, %v1068
    %v1132 = vadd.f32 %v1131, %v1069
    %v1133 = vadd.f32 %v1132, %v1070
    %v1134 = vadd.f32 %v1133, %v1071
    %v1135 = vadd.f32 %v1134, %v1072
    %v1136 = vadd.f32 %v1135, %v1073
    %v1137 = vadd.f32 %v1136, %v1074
    %v1138 = vadd.f32 %v1137, %v1075
    %v1139 = vadd.f32 %v1138, %v1076
    %v1140 = vadd.f32 %v1139, %v1077
    %v1141 = vadd.f32 %v1140, %v1078
    %v1142 = vadd.f32 %v1141, %v1079
    %v1143 = vadd.f32 %v1142, %v1080
    %v1144 = vadd.f32 %v1143, %v1081
    %v1145 = vadd.f32 %v1144, %v1082
    %v1146 = vadd.f32 %v1145, %v1083
    %v1147 = vadd.f32 %v1146, %v1084
    %v1148 = vadd.f32 %v1147, %v1085
    %v1149 = vadd.f32 %v1148, %v1086
    %v1150 = vadd.f32 %v1149, %v1087
    %v1151 = vadd.f32 %v1150, %v1088
    %v1152 = vadd.f32 %v1151, %v1089
    %v1153 = vadd.f32 %v1152, %v1090
    %v1154 = vadd.f32 %v1153, %v1091
    %v1155 = vadd.f32 %v1154, %v1092
    %v1156 = vadd.f32 %v1155, %v1093
    %v1157 = vadd.f32 %v1156, %v1094
    %v1158 = vadd.f32 %v1157, %v1095
    %v1159 = vadd.f32 %v1158, %v1096
    %v1160 = vadd.f32 %v1159, %v1097
    %v1161 = vadd.f32 %v1160, %v1098
    %v1162 = vadd.f32 %v1161, %v1099
    %v1163 = vadd.f32 %v1162, %v1100
    %v1164 = vadd.f32 %v1163, %v1101
    %v1165 = vadd.f32 %v1164, %v1102
    %v1166 = vadd.f32 %v1165, %v1103
    %v1167 = vadd.f32 %v1166, %v1104
    %v1168 = vadd.f32 %v1167, %v1105
    %v1169 = vadd.f32 %v1168, %v1106
    %v1170 = vadd.f32 %v1169, %v1107
    %v1171 = vrot.slane %v1170, 4
    %v1172 = vadd.f32 %v1170, %v1171
    %v1173 = vrot.slane %v1172, 2
    %v1174 = vadd.f32 %v1172, %v1173
    %v1175 = vrot.slane %v1174, 1
    %v1176 = vadd.f32 %v1174, %v1175
    %1177 = vst [vmem:[#allocation10] sm:$0x1] %v1176
    // Predicated region
    $region18: #{tpu_custom_call.1} parent=1 // pred_check
      _
    $region19: #{tpu_custom_call.1} parent=1 // pred_check_branch
      %1179 = sbr.rel (0) target = $region21
    $region20: #{tpu_custom_call.1} parent=1 // pred_region
      %s1181 = ssub.s32 4096, 4096
      %1182 = vsyncadd [#allocation4], %s1181
      %s1183 = sshll.u32 [#allocation7], 4
      %s1184 = int_to_ptr.vmem [resolvable:$true] %s1183
      %1189 = dma.vmem_to_hbm [thread:$0]  %s1184, 4096, %s2, [#allocation4], 64, 64, 4
    $region21: #{tpu_custom_call.1} parent=1 // pred_fallthru
      _
    // Predicated region
    $region22: #{tpu_custom_call.1} parent=1 // pred_check
      _
    $region23: #{tpu_custom_call.1} parent=1 // pred_check_branch
      %1191 = sbr.rel (0) target = $region25
    $region24: #{tpu_custom_call.1} parent=1 // pred_region
      %s1193 = ssub.s32 16, 16
      %1194 = vsyncadd [#allocation9], %s1193
      %s1196 = sshll.u32 [#allocation8], 4
      %s1197 = int_to_ptr.vmem [resolvable:$true] %s1196
      %1199 = dma.vmem_to_hbm [thread:$0]  %s1197, 16, %s3, [#allocation9]
    $region25: #{tpu_custom_call.1} parent=1 // pred_fallthru
      _
    // Predicated region
    $region26: #{tpu_custom_call.1} parent=1 // pred_check
      _
    $region27: #{tpu_custom_call.1} parent=1 // pred_check_branch
      %1201 = sbr.rel (0) target = $region29
    $region28: #{tpu_custom_call.1} parent=1 // pred_region
      %s1203 = ssub.s32 16, 16
      %1204 = vsyncadd [#allocation9], %s1203
      %s1206 = sshll.u32 [#allocation10], 4
      %s1207 = int_to_ptr.vmem [resolvable:$true] %s1206
      %1209 = dma.vmem_to_hbm [thread:$0]  %s1207, 16, %s4, [#allocation9]
    $region29: #{tpu_custom_call.1} parent=1 // pred_fallthru
      _
    // Predicated region
    $region30: #{tpu_custom_call.1} parent=1 // pred_check
      _
    $region31: #{tpu_custom_call.1} parent=1 // pred_check_branch
      %1211 = sbr.rel (0) target = $region33
    $region32: #{tpu_custom_call.1} parent=1 // pred_region
      %1212 = dma.done [#allocation4], 4096
    $region33: #{tpu_custom_call.1} parent=1 // pred_fallthru
      _
    // Predicated region
    $region34: #{tpu_custom_call.1} parent=1 // pred_check
      _
    $region35: #{tpu_custom_call.1} parent=1 // pred_check_branch
      %1214 = sbr.rel (0) target = $region37
    $region36: #{tpu_custom_call.1} parent=1 // pred_region
      %1215 = dma.done [#allocation9], 16
    $region37: #{tpu_custom_call.1} parent=1 // pred_fallthru
      _
    // Predicated region
    $region38: #{tpu_custom_call.1} parent=1 // pred_check
      _
    $region39: #{tpu_custom_call.1} parent=1 // pred_check_branch
      %1217 = sbr.rel (0) target = $region41
    $region40: #{tpu_custom_call.1} parent=1 // pred_region
      %1218 = dma.done [#allocation9], 16
    $region41: #{tpu_custom_call.1} parent=1 // pred_fallthru
      _
    %1219 = vsyncpa [#allocation3], 1
    %1220 = vsyncpa [#allocation6], 1
    %1221 = vsyncpa [#allocation4], 1
    %1222 = vsyncpa [#allocation9], 1

</llo_original>
